<compile_context>
chip_gen: v6e
topology: v6e:2x2x1
jax: 0.10.0
libtpu: 0.0.40
codegen_flags: <defaults>
</compile_context>

<pallas_src>
from functools import partial

import jax
import jax.numpy as jnp
from jax import lax
from jax.experimental import pallas as pl
from jax.experimental.pallas import tpu as pltpu

LANE = 128        # TPU lane width: feature dims padded to a multiple of this
NODE_LANE = 128   # node dim is A's lane / contraction axis -> keep it lane-dense


def _round_up(v, m):
    return (v + m - 1) // m * m


def _pad2d(m, rows, cols):
    out = jnp.zeros((rows, cols), m.dtype)
    return out.at[: m.shape[0], : m.shape[1]].set(m)


def gcn_kernel(a_ref, x_ref, w1_ref, b1_ref, w2_ref, b2_ref, out_ref, xs_ref):
    n = x_ref.shape[0]
    n_pad = xs_ref.shape[0]

    # Stage x: cast to bf16 and zero-pad the phantom-node rows in VMEM.
    # (A_norm's padded rows/cols are exactly zero, so the pad rows only need to
    # be finite; we zero them because scratch VMEM may hold stale NaN patterns.)
    xs_ref[0:n, :] = x_ref[...].astype(jnp.bfloat16)
    if n_pad > n:
        xs_ref[n:n_pad, :] = jnp.zeros((n_pad - n, xs_ref.shape[1]), jnp.bfloat16)

    # Pre-normalized D^-1/2 A D^-1/2, bf16, lane-dense (n_pad, n_pad).
    a = a_ref[...]

    # Layer 1: A_norm @ (x @ W1) + b1, then ReLU (project-then-aggregate).
    s1 = jnp.dot(xs_ref[...], w1_ref[...], preferred_element_type=jnp.float32)
    h = jnp.dot(a, s1.astype(jnp.bfloat16), preferred_element_type=jnp.float32)
    h = jnp.maximum(h + b1_ref[...], 0.0)

    # TODO(synk): nn.Dropout(0.2) is identity at inference; not applied here.

    # Layer 2: A_norm @ (h @ W2) + b2.
    s2 = jnp.dot(h.astype(jnp.bfloat16), w2_ref[...], preferred_element_type=jnp.float32)
    o = jnp.dot(a, s2.astype(jnp.bfloat16), preferred_element_type=jnp.float32) + b2_ref[...]
    out_ref[...] = o.astype(out_ref.dtype)


def prepare_gcn(edge_index, num_nodes, w1, b1, w2, b2):
    """One-time, graph/weight-static preprocessing (the torch module caches the
    normalized adjacency the same way via `cached_adj`).

    Returns (a_norm, w1p, b1p, w2p, b2p); adjacency/weights are bf16
    (MXU-native), biases stay f32. A_norm is padded to a 128-aligned, lane-dense
    square; W1 keeps its K dim unpadded so x needs no host-side padding.
    """
    n_pad = _round_up(num_nodes, NODE_LANE)
    nfeat = w1.shape[0]
    h_pad = _round_up(w1.shape[1], LANE)
    c_pad = _round_up(w2.shape[1], LANE)

    src, dst = edge_index[0], edge_index[1]
    # torch.sparse_coo_tensor(...).to_dense() sums duplicate edges; the
    # fill_diagonal_(0) (add_self_loops=False) is fused into the scatter by
    # masking self-edges to 0.
    vals = (src != dst).astype(jnp.float32)
    adj = jnp.zeros((n_pad, n_pad), jnp.float32).at[src, dst].add(vals)

    # Laplace normalization: D^-1/2 A D^-1/2, with deg==0 -> 0 (padded nodes
    # have deg 0, so their rows/cols stay exactly zero).
    deg = adj.sum(axis=1)
    dinv = jnp.where(deg > 0.0, lax.rsqrt(deg), 0.0)
    a_norm = dinv[:, None] * adj * dinv[None, :]

    # TODO(synk): for the large-N memory-bound regime, quantize A_norm here to
    # 8 bits with a per-row scale folded into dinv (fp8 e4m3 on v7x, int8 on
    # v5e/v6e) and dequantize the f32 accumulator in-kernel: A streams from HBM
    # twice per forward and dominates bytes, so 8-bit A is ~2x on the binding
    # HBM traffic.
    return (
        a_norm.astype(jnp.bfloat16),
        _pad2d(w1, nfeat, h_pad).astype(jnp.bfloat16),   # K dim left unpadded
        _pad2d(b1.reshape(1, -1), 1, h_pad),             # f32 bias, lane-padded
        _pad2d(w2, h_pad, c_pad).astype(jnp.bfloat16),
        _pad2d(b2.reshape(1, -1), 1, c_pad),             # f32 bias, lane-padded
    )


@partial(jax.jit, static_argnames=("nclass",))
def gcn_forward(x, a_norm, w1p, b1p, w2p, b2p, *, nclass):
    n, nfeat = x.shape
    n_pad = a_norm.shape[0]
    h_pad = w1p.shape[1]
    c_pad = w2p.shape[1]

    flops = 2 * (n_pad * nfeat * h_pad          # x @ W1
                 + n_pad * n_pad * h_pad        # A @ s1
                 + n_pad * h_pad * c_pad        # h @ W2
                 + n_pad * n_pad * c_pad)       # A @ s2
    bytes_accessed = (a_norm.size * 2 + x.size * 4
                      + w1p.size * 2 + w2p.size * 2
                      + b1p.size * 4 + b2p.size * 4
                      + n_pad * c_pad * 2)

    # Single VMEM block, no grid: at N=64 the whole problem (~64 KB) is a
    # handful of MXU passes and is dispatch/DMA-latency bound; a grid would
    # only add per-step overhead with nothing to hide it under.
    #
    # TODO(synk): large-N (N >~ 2-4k) tiled plan, kept inside ONE pallas_call
    # for both layers so the A-streaming pipeline warm-up is paid once:
    #   * grid over A row blocks ("parallel") x node/K blocks ("arbitrary")
    #     with an f32 VMEM accumulator; keep S = x@W1 (N x h_pad bf16) resident
    #     in VMEM so only A streams from HBM (A traffic dominates; mem-bound).
    #   * v6e: TM multiple of 256 (2x256x256 MXU), TK 1024-2048 bf16, raise
    #     vmem_limit_bytes toward the 128 MiB physical budget.
    #   * v7x: halve the A block (TM ~256 / TK ~1024), keep live VMEM (double-
    #     buffered A block + resident S/H/W + acc) under ~48 MiB (64 MiB phys),
    #     and keep the row axis "parallel" so both TensorCores are used.
    #   * v5e: TM multiple of 128 (4x128x128 MXU); ~2-4 MiB A buffers or raise
    #     the 16 MiB default scoped VMEM via CompilerParams(vmem_limit_bytes=).
    vmem = pl.BlockSpec(memory_space=pltpu.MemorySpace.VMEM)
    out = pl.pallas_call(
        gcn_kernel,
        out_shape=jax.ShapeDtypeStruct((n_pad, c_pad), jnp.bfloat16),
        in_specs=[vmem] * 6,
        out_specs=vmem,
        scratch_shapes=[pltpu.VMEM((n_pad, nfeat), jnp.bfloat16)],
        cost_estimate=pl.CostEstimate(
            flops=flops, transcendentals=0, bytes_accessed=bytes_accessed),
    )(a_norm, x, w1p, b1p, w2p, b2p)
    # Output stays bf16 (halves kernel writeback; downstream argmax/loss does
    # not need f32). Slice back to the logical shape.
    return out[:n, :nclass]


def _reference(x, edge_index, w1, b1, w2, b2, compute_dtype=jnp.float32):
    """Pure-JAX reference; compute_dtype=bf16 mirrors the kernel's cast scheme."""
    n = x.shape[0]
    src, dst = edge_index[0], edge_index[1]
    vals = (src != dst).astype(jnp.float32)
    adj = jnp.zeros((n, n), jnp.float32).at[src, dst].add(vals)
    deg = adj.sum(axis=1)
    dinv = jnp.where(deg > 0.0, lax.rsqrt(deg), 0.0)
    a = (dinv[:, None] * adj * dinv[None, :]).astype(compute_dtype)

    def conv(h, w, b):
        s = jnp.dot(h.astype(compute_dtype), w.astype(compute_dtype),
                    preferred_element_type=jnp.float32)
        return jnp.dot(a, s.astype(compute_dtype),
                       preferred_element_type=jnp.float32) + b

    h = jnp.maximum(conv(x, w1, b1), 0.0)
    return conv(h, w2, b2)


if __name__ == "__main__":
    N, NFEAT, NHID, NCLASS, NEDGE = 64, 32, 16, 8, 256

    key = jax.random.PRNGKey(0)
    kx, ke, kw1, kw2 = jax.random.split(key, 4)

    x = jax.random.normal(kx, (N, NFEAT), dtype=jnp.float32)
    edge_index = jax.random.randint(ke, (2, NEDGE), 0, N, dtype=jnp.int32)

    # Deterministic kaiming-uniform-style init (bound = sqrt(6 / fan_in)), zero bias.
    def kaiming_uniform(k, fan_in, shape):
        bound = (6.0 / fan_in) ** 0.5
        return jax.random.uniform(k, shape, jnp.float32, -bound, bound)

    w1 = kaiming_uniform(kw1, NHID, (NFEAT, NHID))     # torch fan_in = size(1)
    b1 = jnp.zeros((NHID,), jnp.float32)
    w2 = kaiming_uniform(kw2, NCLASS, (NHID, NCLASS))
    b2 = jnp.zeros((NCLASS,), jnp.float32)

    # One-time graph/weight-static preprocessing (hoisted out of the hot path).
    a_norm, w1p, b1p, w2p, b2p = prepare_gcn(edge_index, N, w1, b1, w2, b2)

    out = jax.block_until_ready(
        gcn_forward(x, a_norm, w1p, b1p, w2p, b2p, nclass=NCLASS)
    )
    out_f32 = out.astype(jnp.float32)

    # Tight-ish check against a reference with the identical bf16 cast scheme
    # (the kernel additionally rounds its output to bf16) ...
    ref_bf16 = _reference(x, edge_index, w1, b1, w2, b2, jnp.bfloat16)
    # ... and a loose sanity check against the pure-f32 reference (torch semantics).
    ref_f32 = _reference(x, edge_index, w1, b1, w2, b2, jnp.float32)

    assert out.shape == (N, NCLASS)
    assert out.dtype == jnp.bfloat16
    assert jnp.allclose(out_f32, ref_bf16, atol=3e-2, rtol=3e-2)
    assert jnp.allclose(out_f32, ref_f32, atol=3e-1, rtol=1.5e-1)
    print("KERNEL_OK")
</pallas_src>

<mosaic_0001>
module attributes {stable_mosaic.version = 11 : i64} {
  func.func @gcn_kernel(%arg0: memref<128x128xbf16, #tpu.memory_space<vmem>>, %arg1: memref<64x32xf32, #tpu.memory_space<vmem>>, %arg2: memref<32x128xbf16, #tpu.memory_space<vmem>>, %arg3: memref<1x128xf32, #tpu.memory_space<vmem>>, %arg4: memref<128x128xbf16, #tpu.memory_space<vmem>>, %arg5: memref<1x128xf32, #tpu.memory_space<vmem>>, %arg6: memref<128x128xbf16, #tpu.memory_space<vmem>>, %arg7: memref<128x32xbf16, #tpu.memory_space<vmem>>) attributes {dimension_semantics = [], scalar_prefetch = 0 : i64, scratch_operands = 1 : i64, tpu.core_type = #tpu.core_type<tc>} {
    %c0 = arith.constant 0 : index
    %c0_0 = arith.constant 0 : index
    %0 = vector.load %arg1[%c0, %c0_0] : memref<64x32xf32, #tpu.memory_space<vmem>>, vector<64x32xf32>
    %1 = arith.truncf %0 : vector<64x32xf32> to vector<64x32xbf16>
    %c0_1 = arith.constant 0 : index
    %c0_2 = arith.constant 0 : index
    %2 = vector.load %arg7[%c0_1, %c0_2] : memref<128x32xbf16, #tpu.memory_space<vmem>>, vector<64x32xbf16>
    tpu.vector_store %arg7[%c0_1, %c0_2], %1 {strides = array<i32>} : memref<128x32xbf16, #tpu.memory_space<vmem>>, vector<64x32xbf16>,
    %cst = arith.constant 0.000000e+00 : bf16
    %3 = vector.broadcast %cst : bf16 to vector<64x32xbf16>
    %c64 = arith.constant 64 : index
    %c0_3 = arith.constant 0 : index
    %4 = vector.load %arg7[%c64, %c0_3] : memref<128x32xbf16, #tpu.memory_space<vmem>>, vector<64x32xbf16>
    tpu.vector_store %arg7[%c64, %c0_3], %3 {strides = array<i32>} : memref<128x32xbf16, #tpu.memory_space<vmem>>, vector<64x32xbf16>,
    %c0_4 = arith.constant 0 : index
    %c0_5 = arith.constant 0 : index
    %5 = vector.load %arg0[%c0_4, %c0_5] : memref<128x128xbf16, #tpu.memory_space<vmem>>, vector<128x128xbf16>
    %c0_6 = arith.constant 0 : index
    %c0_7 = arith.constant 0 : index
    %6 = vector.load %arg7[%c0_6, %c0_7] : memref<128x32xbf16, #tpu.memory_space<vmem>>, vector<128x32xbf16>
    %c0_8 = arith.constant 0 : index
    %c0_9 = arith.constant 0 : index
    %7 = vector.load %arg2[%c0_8, %c0_9] : memref<32x128xbf16, #tpu.memory_space<vmem>>, vector<32x128xbf16>
    %cst_10 = arith.constant dense<0.000000e+00> : vector<128x128xf32>
    %8 = tpu.matmul %6, %7, %cst_10 {dimension_numbers = #tpu.dot_dimension_numbers<[1], [0], [0], [1], [0, 0, 1, 1], [], []>} : vector<128x32xbf16>, vector<32x128xbf16>, vector<128x128xf32> -> vector<128x128xf32>
    %9 = arith.truncf %8 : vector<128x128xf32> to vector<128x128xbf16>
    %cst_11 = arith.constant dense<0.000000e+00> : vector<128x128xf32>
    %10 = tpu.matmul %5, %9, %cst_11 {dimension_numbers = #tpu.dot_dimension_numbers<[1], [0], [0], [1], [0, 0, 1, 1], [], []>} : vector<128x128xbf16>, vector<128x128xbf16>, vector<128x128xf32> -> vector<128x128xf32>
    %c0_12 = arith.constant 0 : index
    %c0_13 = arith.constant 0 : index
    %11 = vector.load %arg3[%c0_12, %c0_13] : memref<1x128xf32, #tpu.memory_space<vmem>>, vector<1x128xf32>
    %12 = vector.broadcast %11 : vector<1x128xf32> to vector<128x128xf32>
    %13 = arith.addf %10, %12 : vector<128x128xf32>
    %cst_14 = arith.constant 0.000000e+00 : f32
    %14 = vector.broadcast %cst_14 : f32 to vector<128x128xf32>
    %15 = arith.maximumf %13, %14 : vector<128x128xf32>
    %16 = arith.truncf %15 : vector<128x128xf32> to vector<128x128xbf16>
    %c0_15 = arith.constant 0 : index
    %c0_16 = arith.constant 0 : index
    %17 = vector.load %arg4[%c0_15, %c0_16] : memref<128x128xbf16, #tpu.memory_space<vmem>>, vector<128x128xbf16>
    %cst_17 = arith.constant dense<0.000000e+00> : vector<128x128xf32>
    %18 = tpu.matmul %16, %17, %cst_17 {dimension_numbers = #tpu.dot_dimension_numbers<[1], [0], [0], [1], [0, 0, 1, 1], [], []>} : vector<128x128xbf16>, vector<128x128xbf16>, vector<128x128xf32> -> vector<128x128xf32>
    %19 = arith.truncf %18 : vector<128x128xf32> to vector<128x128xbf16>
    %cst_18 = arith.constant dense<0.000000e+00> : vector<128x128xf32>
    %20 = tpu.matmul %5, %19, %cst_18 {dimension_numbers = #tpu.dot_dimension_numbers<[1], [0], [0], [1], [0, 0, 1, 1], [], []>} : vector<128x128xbf16>, vector<128x128xbf16>, vector<128x128xf32> -> vector<128x128xf32>
    %c0_19 = arith.constant 0 : index
    %c0_20 = arith.constant 0 : index
    %21 = vector.load %arg5[%c0_19, %c0_20] : memref<1x128xf32, #tpu.memory_space<vmem>>, vector<1x128xf32>
    %22 = vector.broadcast %21 : vector<1x128xf32> to vector<128x128xf32>
    %23 = arith.addf %20, %22 : vector<128x128xf32>
    %24 = arith.truncf %23 : vector<128x128xf32> to vector<128x128xbf16>
    %c0_21 = arith.constant 0 : index
    %c0_22 = arith.constant 0 : index
    %25 = vector.load %arg6[%c0_21, %c0_22] : memref<128x128xbf16, #tpu.memory_space<vmem>>, vector<128x128xbf16>
    tpu.vector_store %arg6[%c0_21, %c0_22], %24 {strides = array<i32>} : memref<128x128xbf16, #tpu.memory_space<vmem>>, vector<128x128xbf16>,
    return
  }
}

</mosaic_0001>

<llo_original>
// kernel: gcn_forward.1
$region0: #{gcn_forward.1}
  #allocation0 [shape = 'u32[]', space=smem, size = 0x4, offset = 0x4, fixed_abs, tag = 'smem constant byte address 0x4 - core index']
  #allocation1 [shape = 'u32[144,128]{1,0:T(1,128)}', space=vmem, size = 0x12000, scoped, tag = 'internal scratch']
  #allocation2 [shape = 'bf16[128,32]{1,0:T(8,128)(2,1)}', space=vmem, size = 0x8000, scoped, tag = 'scratch operand']
  %s0 = inlined_call_operand.vmem [shape: bf16[128,128], index: 0, kind: input, shape index: {}]
  %s1 = inlined_call_operand.vmem [shape: f32[64,32], index: 1, kind: input, shape index: {}]
  %s2 = inlined_call_operand.vmem [shape: bf16[32,128], index: 2, kind: input, shape index: {}]
  %s3 = inlined_call_operand.vmem [shape: f32[1,128], index: 3, kind: input, shape index: {}]
  %s4 = inlined_call_operand.hbm [shape: bf16[128,128], index: 4, kind: input, shape index: {}]
  %s5 = inlined_call_operand.vmem [shape: f32[1,128], index: 5, kind: input, shape index: {}]
  %s6 = inlined_call_operand.vmem [shape: bf16[128,128], index: 6, kind: output, shape index: {}]
  %s7 = sld [smem:[#allocation0]]
  $region38: #{gcn_forward.1} parent=0
    _
  %s9 = ssub.s32 1, %s7
  %s10 = scalar_select 0, %s9, %s7
  $region1: #{gcn_forward.1} parent=0
    #allocation3 [shape = 'u8[32768]{0}', space=vmem, size = 0x8000, scoped, tag = 'input window, operand 4, single buffered']
    #allocation4 [shape = 's32[1]{0}', space=sflag, size = 0x4, scoped, tag = 'scoped memory for gcn_forward.1']
    %11 = vsyncpa [#allocation4], 0
    // Predicated region
    $region2: #{gcn_forward.1} parent=1 // pred_check
      _
    $region3: #{gcn_forward.1} parent=1 // pred_check_branch
      %13 = sbr.rel (0) target = $region5
    $region4: #{gcn_forward.1} parent=1 // pred_region
      _
    $region5: #{gcn_forward.1} parent=1 // pred_fallthru
      _
    // Predicated region
    $region6: #{gcn_forward.1} parent=1 // pred_check
      _
    $region7: #{gcn_forward.1} parent=1 // pred_check_branch
      %15 = sbr.rel (0) target = $region9
    $region8: #{gcn_forward.1} parent=1 // pred_region
      _
    $region9: #{gcn_forward.1} parent=1 // pred_fallthru
      _
    // Predicated region
    $region10: #{gcn_forward.1} parent=1 // pred_check
      _
    $region11: #{gcn_forward.1} parent=1 // pred_check_branch
      %17 = sbr.rel (0) target = $region13
    $region12: #{gcn_forward.1} parent=1 // pred_region
      _
    $region13: #{gcn_forward.1} parent=1 // pred_fallthru
      _
    // Predicated region
    $region14: #{gcn_forward.1} parent=1 // pred_check
      _
    $region15: #{gcn_forward.1} parent=1 // pred_check_branch
      %19 = sbr.rel (0) target = $region17
    $region16: #{gcn_forward.1} parent=1 // pred_region
      _
    $region17: #{gcn_forward.1} parent=1 // pred_fallthru
      _
    // Predicated region
    $region18: #{gcn_forward.1} parent=1 // pred_check
      _
    $region19: #{gcn_forward.1} parent=1 // pred_check_branch
      %21 = sbr.rel (0) target = $region21
    $region20: #{gcn_forward.1} parent=1 // pred_region
      %s23 = ssub.s32 1024, 1024
      %24 = vsyncadd [#allocation4], %s23
      %s25 = sshll.u32 [#allocation3], 4
      %s26 = int_to_ptr.vmem [resolvable:$true] %s25
      %31 = dma.hbm_to_vmem [thread:$0]  %s4, 1024, %s26, [#allocation4], 64, 64, 4
    $region21: #{gcn_forward.1} parent=1 // pred_fallthru
      _
    // Predicated region
    $region22: #{gcn_forward.1} parent=1 // pred_check
      _
    $region23: #{gcn_forward.1} parent=1 // pred_check_branch
      %33 = sbr.rel (0) target = $region25
    $region24: #{gcn_forward.1} parent=1 // pred_region
      _
    $region25: #{gcn_forward.1} parent=1 // pred_fallthru
      _
    // Predicated region
    $region26: #{gcn_forward.1} parent=1 // pred_check
      _
    $region27: #{gcn_forward.1} parent=1 // pred_check_branch
      %35 = sbr.rel (0) target = $region29
    $region28: #{gcn_forward.1} parent=1 // pred_region
      %36 = dma.done [#allocation4], 1024
    $region29: #{gcn_forward.1} parent=1 // pred_fallthru
      _
    %v38 = vld [vmem:[%s1] sm:$0xff]
    %v39 = vld [vmem:[%s1 + $0x8] sm:$0xff]
    %v40 = vld [vmem:[%s1 + $0x10] sm:$0xff]
    %v41 = vld [vmem:[%s1 + $0x18] sm:$0xff]
    %v42 = vld [vmem:[%s1 + $0x20] sm:$0xff]
    %v43 = vld [vmem:[%s1 + $0x28] sm:$0xff]
    %v44 = vld [vmem:[%s1 + $0x30] sm:$0xff]
    %v45 = vld [vmem:[%s1 + $0x38] sm:$0xff]
    %v46 = vpack.c.bf16 %v39, %v38
    %v47 = vpack.c.bf16 %v41, %v40
    %v48 = vpack.c.bf16 %v43, %v42
    %v49 = vpack.c.bf16 %v45, %v44
    %v54 = vunpack.c.l.b16 %v46
    %v55 = vunpack.c.h.b16 %v46
    %v56 = vunpack.c.l.b16 %v47
    %v57 = vunpack.c.h.b16 %v47
    %v58 = vunpack.c.l.b16 %v48
    %v59 = vunpack.c.h.b16 %v48
    %v60 = vunpack.c.l.b16 %v49
    %v61 = vunpack.c.h.b16 %v49
    %v62 = vpack.c.b16 %v54, %v54
    %v63 = vpack.c.b16 %v55, %v55
    %v64 = vpack.c.b16 %v56, %v56
    %v65 = vpack.c.b16 %v57, %v57
    %v66 = vpack.c.b16 %v58, %v58
    %v67 = vpack.c.b16 %v59, %v59
    %v68 = vpack.c.b16 %v60, %v60
    %v69 = vpack.c.b16 %v61, %v61
    %vm78 = vcmask 257024
    %79 = vst.msk [vmem:[#allocation2] sm:$0xf] %vm78, %v62
    %80 = vst.msk [vmem:[#allocation2 + $0x4] sm:$0xf] %vm78, %v63
    %81 = vst.msk [vmem:[#allocation2 + $0x8] sm:$0xf] %vm78, %v64
    %82 = vst.msk [vmem:[#allocation2 + $0xc] sm:$0xf] %vm78, %v65
    %83 = vst.msk [vmem:[#allocation2 + $0x10] sm:$0xf] %vm78, %v66
    %84 = vst.msk [vmem:[#allocation2 + $0x14] sm:$0xf] %vm78, %v67
    %85 = vst.msk [vmem:[#allocation2 + $0x18] sm:$0xf] %vm78, %v68
    %86 = vst.msk [vmem:[#allocation2 + $0x1c] sm:$0xf] %vm78, %v69
    %87 = vst.msk [vmem:[#allocation2 + $0x20] sm:$0xf] %vm78, 0
    %88 = vst.msk [vmem:[#allocation2 + $0x24] sm:$0xf] %vm78, 0
    %89 = vst.msk [vmem:[#allocation2 + $0x28] sm:$0xf] %vm78, 0
    %90 = vst.msk [vmem:[#allocation2 + $0x2c] sm:$0xf] %vm78, 0
    %91 = vst.msk [vmem:[#allocation2 + $0x30] sm:$0xf] %vm78, 0
    %92 = vst.msk [vmem:[#allocation2 + $0x34] sm:$0xf] %vm78, 0
    %93 = vst.msk [vmem:[#allocation2 + $0x38] sm:$0xf] %vm78, 0
    %94 = vst.msk [vmem:[#allocation2 + $0x3c] sm:$0xf] %vm78, 0
    %v95 = vld [vmem:[%s0] sm:$0xf]
    %v96 = vld [vmem:[%s0 + $0x4] sm:$0xf]
    %v97 = vld [vmem:[%s0 + $0x8] sm:$0xf]
    %v98 = vld [vmem:[%s0 + $0xc] sm:$0xf]
    %v99 = vld [vmem:[%s0 + $0x10] sm:$0xf]
    %v100 = vld [vmem:[%s0 + $0x14] sm:$0xf]
    %v101 = vld [vmem:[%s0 + $0x18] sm:$0xf]
    %v102 = vld [vmem:[%s0 + $0x1c] sm:$0xf]
    %v103 = vld [vmem:[%s0 + $0x20] sm:$0xf]
    %v104 = vld [vmem:[%s0 + $0x24] sm:$0xf]
    %v105 = vld [vmem:[%s0 + $0x28] sm:$0xf]
    %v106 = vld [vmem:[%s0 + $0x2c] sm:$0xf]
    %v107 = vld [vmem:[%s0 + $0x30] sm:$0xf]
    %v108 = vld [vmem:[%s0 + $0x34] sm:$0xf]
    %v109 = vld [vmem:[%s0 + $0x38] sm:$0xf]
    %v110 = vld [vmem:[%s0 + $0x3c] sm:$0xf]
    %v111 = vld [vmem:[#allocation2] sm:$0xf]
    %v112 = vld [vmem:[#allocation2 + $0x4] sm:$0xf]
    %v113 = vld [vmem:[#allocation2 + $0x8] sm:$0xf]
    %v114 = vld [vmem:[#allocation2 + $0xc] sm:$0xf]
    %v115 = vld [vmem:[#allocation2 + $0x10] sm:$0xf]
    %v116 = vld [vmem:[#allocation2 + $0x14] sm:$0xf]
    %v117 = vld [vmem:[#allocation2 + $0x18] sm:$0xf]
    %v118 = vld [vmem:[#allocation2 + $0x1c] sm:$0xf]
    %v119 = vld [vmem:[#allocation2 + $0x20] sm:$0xf]
    %v120 = vld [vmem:[#allocation2 + $0x24] sm:$0xf]
    %v121 = vld [vmem:[#allocation2 + $0x28] sm:$0xf]
    %v122 = vld [vmem:[#allocation2 + $0x2c] sm:$0xf]
    %v123 = vld [vmem:[#allocation2 + $0x30] sm:$0xf]
    %v124 = vld [vmem:[#allocation2 + $0x34] sm:$0xf]
    %v125 = vld [vmem:[#allocation2 + $0x38] sm:$0xf]
    %v126 = vld [vmem:[#allocation2 + $0x3c] sm:$0xf]
    %v127 = vld [vmem:[%s2] sm:$0xf]
    %v128 = vld [vmem:[%s2 + $0x4] sm:$0xf]
    %v129 = vld [vmem:[%s2 + $0x8] sm:$0xf]
    %v130 = vld [vmem:[%s2 + $0xc] sm:$0xf]
    %v147 = vunpack.c.l.b16 %v111
    %v148 = vunpack.c.l.b16 %v112
    %v149 = vunpack.c.l.b16 %v113
    %v150 = vunpack.c.l.b16 %v114
    %v151 = vunpack.c.l.b16 %v115
    %v152 = vunpack.c.l.b16 %v116
    %v153 = vunpack.c.l.b16 %v117
    %v154 = vunpack.c.l.b16 %v118
    %v155 = vunpack.c.l.b16 %v119
    %v156 = vunpack.c.l.b16 %v120
    %v157 = vunpack.c.l.b16 %v121
    %v158 = vunpack.c.l.b16 %v122
    %v159 = vunpack.c.l.b16 %v123
    %v160 = vunpack.c.l.b16 %v124
    %v161 = vunpack.c.l.b16 %v125
    %v162 = vunpack.c.l.b16 %v126
    %v163 = vpack.c.b16 %v148, %v147
    %v164 = vpack.c.b16 %v150, %v149
    %v165 = vpack.c.b16 %v152, %v151
    %v166 = vpack.c.b16 %v154, %v153
    %v167 = vpack.c.b16 %v156, %v155
    %v168 = vpack.c.b16 %v158, %v157
    %v169 = vpack.c.b16 %v160, %v159
    %v170 = vpack.c.b16 %v162, %v161
    %v175 = vunpack.c.l.b16 %v127
    %v176 = vunpack.c.l.b16 %v128
    %v177 = vunpack.c.l.b16 %v129
    %v178 = vunpack.c.l.b16 %v130
    %v179 = vpack.c.b16 %v176, %v175
    %v180 = vpack.c.b16 %v178, %v177
    %vm183 = vcmask 261120
    %v185 = vsel %vm183, %v163, 0
    %v188 = vsel %vm183, %v164, 0
    %v191 = vsel %vm183, %v165, 0
    %v194 = vsel %vm183, %v166, 0
    %v197 = vsel %vm183, %v167, 0
    %v200 = vsel %vm183, %v168, 0
    %v203 = vsel %vm183, %v169, 0
    %v206 = vsel %vm183, %v170, 0
    %208 = vmatprep.subr.bf16.mxu0 0
    %209 = vmatpush1.bf16.msra.mxu0 0
    %210 = vmatprep.subr.bf16.mxu0 0
    %211 = vmatpush1.bf16.msra.mxu0 0
    %212 = vmatprep.subr.bf16.mxu0 0
    %213 = vmatpush1.bf16.msra.mxu0 0
    %214 = vmatprep.subr.bf16.mxu0 0
    %215 = vmatpush1.bf16.msra.mxu0 0
    %216 = vmatprep.subr.bf16.mxu0 0
    %217 = vmatpush1.bf16.msra.mxu0 0
    %218 = vmatprep.subr.bf16.mxu0 0
    %219 = vmatpush1.bf16.msra.mxu0 0
    %220 = vmatprep.subr.bf16.mxu0 0
    %221 = vmatpush1.bf16.msra.mxu0 %v180
    %222 = vmatprep.subr.bf16.mxu0 0
    %223 = vmatpush1.bf16.msra.mxu0 %v179
    %224 = vmatprep.subr.bf16.mxu0 0
    %225 = vmatpush2.bf16.msra.mxu0 0
    %226 = vmatprep.subr.bf16.mxu0 0
    %227 = vmatpush2.bf16.msra.mxu0 0
    %228 = vmatprep.subr.bf16.mxu0 0
    %229 = vmatpush2.bf16.msra.mxu0 0
    %230 = vmatprep.subr.bf16.mxu0 0
    %231 = vmatpush2.bf16.msra.mxu0 0
    %232 = vmatprep.subr.bf16.mxu0 0
    %233 = vmatpush2.bf16.msra.mxu0 0
    %234 = vmatprep.subr.bf16.mxu0 0
    %235 = vmatpush2.bf16.msra.mxu0 0
    %236 = vmatprep.subr.bf16.mxu0 0
    %237 = vmatpush2.bf16.msra.mxu0 0
    %238 = vmatprep.subr.bf16.mxu0 0
    %239 = vmatpush2.bf16.msra.mxu0 0
    %240 = vmatprep.mubr.bf16.mxu0 0
    %241 = vmatmul.mubr.bf16.gmra.mxu0 %v185
    %v242 = vpop.f32.mrf.mxu0
    %v243 = vadd.f32 0.0, %v242
    %v244 = vpop.f32.mrf.mxu0
    %v245 = vpop.f32.mrf.mxu0
    %v246 = vadd.f32 0.0, %v245
    %v247 = vpop.f32.mrf.mxu0
    %248 = vmatprep.mubr.bf16.mxu0 0
    %249 = vmatmul.mubr.bf16.gmra.mxu0 %v188
    %v250 = vpop.f32.mrf.mxu0
    %v251 = vadd.f32 0.0, %v250
    %v252 = vpop.f32.mrf.mxu0
    %v253 = vpop.f32.mrf.mxu0
    %v254 = vadd.f32 0.0, %v253
    %v255 = vpop.f32.mrf.mxu0
    %256 = vmatprep.mubr.bf16.mxu0 0
    %257 = vmatmul.mubr.bf16.gmra.mxu0 %v191
    %v258 = vpop.f32.mrf.mxu0
    %v259 = vadd.f32 0.0, %v258
    %v260 = vpop.f32.mrf.mxu0
    %v261 = vpop.f32.mrf.mxu0
    %v262 = vadd.f32 0.0, %v261
    %v263 = vpop.f32.mrf.mxu0
    %264 = vmatprep.mubr.bf16.mxu0 0
    %265 = vmatmul.mubr.bf16.gmra.mxu0 %v194
    %v266 = vpop.f32.mrf.mxu0
    %v267 = vadd.f32 0.0, %v266
    %v268 = vpop.f32.mrf.mxu0
    %v269 = vpop.f32.mrf.mxu0
    %v270 = vadd.f32 0.0, %v269
    %v271 = vpop.f32.mrf.mxu0
    %272 = vmatprep.mubr.bf16.mxu0 0
    %273 = vmatmul.mubr.bf16.gmra.mxu0 %v197
    %v274 = vpop.f32.mrf.mxu0
    %v275 = vadd.f32 0.0, %v274
    %v276 = vpop.f32.mrf.mxu0
    %v277 = vpop.f32.mrf.mxu0
    %v278 = vadd.f32 0.0, %v277
    %v279 = vpop.f32.mrf.mxu0
    %280 = vmatprep.mubr.bf16.mxu0 0
    %281 = vmatmul.mubr.bf16.gmra.mxu0 %v200
    %v282 = vpop.f32.mrf.mxu0
    %v283 = vadd.f32 0.0, %v282
    %v284 = vpop.f32.mrf.mxu0
    %v285 = vpop.f32.mrf.mxu0
    %v286 = vadd.f32 0.0, %v285
    %v287 = vpop.f32.mrf.mxu0
    %288 = vmatprep.mubr.bf16.mxu0 0
    %289 = vmatmul.mubr.bf16.gmra.mxu0 %v203
    %v290 = vpop.f32.mrf.mxu0
    %v291 = vadd.f32 0.0, %v290
    %v292 = vpop.f32.mrf.mxu0
    %v293 = vpop.f32.mrf.mxu0
    %v294 = vadd.f32 0.0, %v293
    %v295 = vpop.f32.mrf.mxu0
    %296 = vmatprep.mubr.bf16.mxu0 0
    %297 = vmatmul.mubr.bf16.gmra.mxu0 %v206
    %v298 = vpop.f32.mrf.mxu0
    %v299 = vadd.f32 0.0, %v298
    %v300 = vpop.f32.mrf.mxu0
    %v301 = vpop.f32.mrf.mxu0
    %v302 = vadd.f32 0.0, %v301
    %v303 = vpop.f32.mrf.mxu0
    %304 = vdwg.mxu0
    %v305 = vpack.c.bf16 %v246, %v243
    %v306 = vpack.c.bf16 %v254, %v251
    %v307 = vpack.c.bf16 %v262, %v259
    %v308 = vpack.c.bf16 %v270, %v267
    %v309 = vpack.c.bf16 %v278, %v275
    %v310 = vpack.c.bf16 %v286, %v283
    %v311 = vpack.c.bf16 %v294, %v291
    %v312 = vpack.c.bf16 %v302, %v299
    %v313 = vld [vmem:[%s3] sm:$0x1]
    %v315 = vlaneseq
    %v316 = vshrl.u32 %v315, 7
    %v317 = vsub.s32 0, %v316
    %v318 = vrot.slane %v313, %v317
    %v336 = vunpack.c.l.b16 %v95
    %v337 = vunpack.c.l.b16 %v96
    %v338 = vunpack.c.l.b16 %v97
    %v339 = vunpack.c.l.b16 %v98
    %v340 = vunpack.c.l.b16 %v99
    %v341 = vunpack.c.l.b16 %v100
    %v342 = vunpack.c.l.b16 %v101
    %v343 = vunpack.c.l.b16 %v102
    %v344 = vunpack.c.l.b16 %v103
    %v345 = vunpack.c.l.b16 %v104
    %v346 = vunpack.c.l.b16 %v105
    %v347 = vunpack.c.l.b16 %v106
    %v348 = vunpack.c.l.b16 %v107
    %v349 = vunpack.c.l.b16 %v108
    %v350 = vunpack.c.l.b16 %v109
    %v351 = vunpack.c.l.b16 %v110
    %v352 = vpack.c.b16 %v337, %v336
    %v353 = vpack.c.b16 %v339, %v338
    %v354 = vpack.c.b16 %v341, %v340
    %v355 = vpack.c.b16 %v343, %v342
    %v356 = vpack.c.b16 %v345, %v344
    %v357 = vpack.c.b16 %v347, %v346
    %v358 = vpack.c.b16 %v349, %v348
    %v359 = vpack.c.b16 %v351, %v350
    %368 = vmatprep.subr.bf16.mxu0 0
    %369 = vmatpush1.bf16.msra.mxu0 %v312
    %370 = vmatprep.subr.bf16.mxu0 0
    %371 = vmatpush1.bf16.msra.mxu0 %v311
    %372 = vmatprep.subr.bf16.mxu0 0
    %373 = vmatpush1.bf16.msra.mxu0 %v310
    %374 = vmatprep.subr.bf16.mxu0 0
    %375 = vmatpush1.bf16.msra.mxu0 %v309
    %376 = vmatprep.subr.bf16.mxu0 0
    %377 = vmatpush1.bf16.msra.mxu0 %v308
    %378 = vmatprep.subr.bf16.mxu0 0
    %379 = vmatpush1.bf16.msra.mxu0 %v307
    %380 = vmatprep.subr.bf16.mxu0 0
    %381 = vmatpush1.bf16.msra.mxu0 %v306
    %382 = vmatprep.subr.bf16.mxu0 0
    %383 = vmatpush1.bf16.msra.mxu0 %v305
    %384 = vmatprep.subr.bf16.mxu0 0
    %385 = vmatpush2.bf16.msra.mxu0 0
    %386 = vmatprep.subr.bf16.mxu0 0
    %387 = vmatpush2.bf16.msra.mxu0 0
    %388 = vmatprep.subr.bf16.mxu0 0
    %389 = vmatpush2.bf16.msra.mxu0 0
    %390 = vmatprep.subr.bf16.mxu0 0
    %391 = vmatpush2.bf16.msra.mxu0 0
    %392 = vmatprep.subr.bf16.mxu0 0
    %393 = vmatpush2.bf16.msra.mxu0 0
    %394 = vmatprep.subr.bf16.mxu0 0
    %395 = vmatpush2.bf16.msra.mxu0 0
    %396 = vmatprep.subr.bf16.mxu0 0
    %397 = vmatpush2.bf16.msra.mxu0 0
    %398 = vmatprep.subr.bf16.mxu0 0
    %399 = vmatpush2.bf16.msra.mxu0 0
    %400 = vmatprep.mubr.bf16.mxu0 0
    %401 = vmatmul.mubr.bf16.gmra.mxu0 %v352
    %v402 = vpop.f32.mrf.mxu0
    %v403 = vadd.f32 %v318, %v402
    %v404 = vpop.f32.mrf.mxu0
    %v405 = vpop.f32.mrf.mxu0
    %v406 = vadd.f32 %v318, %v405
    %v407 = vpop.f32.mrf.mxu0
    %408 = vmatprep.mubr.bf16.mxu0 0
    %409 = vmatmul.mubr.bf16.gmra.mxu0 %v353
    %v410 = vpop.f32.mrf.mxu0
    %v411 = vadd.f32 %v318, %v410
    %v412 = vpop.f32.mrf.mxu0
    %v413 = vpop.f32.mrf.mxu0
    %v414 = vadd.f32 %v318, %v413
    %v415 = vpop.f32.mrf.mxu0
    %416 = vmatprep.mubr.bf16.mxu0 0
    %417 = vmatmul.mubr.bf16.gmra.mxu0 %v354
    %v418 = vpop.f32.mrf.mxu0
    %v419 = vadd.f32 %v318, %v418
    %v420 = vpop.f32.mrf.mxu0
    %v421 = vpop.f32.mrf.mxu0
    %v422 = vadd.f32 %v318, %v421
    %v423 = vpop.f32.mrf.mxu0
    %424 = vmatprep.mubr.bf16.mxu0 0
    %425 = vmatmul.mubr.bf16.gmra.mxu0 %v355
    %v426 = vpop.f32.mrf.mxu0
    %v427 = vadd.f32 %v318, %v426
    %v428 = vpop.f32.mrf.mxu0
    %v429 = vpop.f32.mrf.mxu0
    %v430 = vadd.f32 %v318, %v429
    %v431 = vpop.f32.mrf.mxu0
    %432 = vmatprep.mubr.bf16.mxu0 0
    %433 = vmatmul.mubr.bf16.gmra.mxu0 %v356
    %v434 = vpop.f32.mrf.mxu0
    %v435 = vadd.f32 %v318, %v434
    %v436 = vpop.f32.mrf.mxu0
    %v437 = vpop.f32.mrf.mxu0
    %v438 = vadd.f32 %v318, %v437
    %v439 = vpop.f32.mrf.mxu0
    %440 = vmatprep.mubr.bf16.mxu0 0
    %441 = vmatmul.mubr.bf16.gmra.mxu0 %v357
    %v442 = vpop.f32.mrf.mxu0
    %v443 = vadd.f32 %v318, %v442
    %v444 = vpop.f32.mrf.mxu0
    %v445 = vpop.f32.mrf.mxu0
    %v446 = vadd.f32 %v318, %v445
    %v447 = vpop.f32.mrf.mxu0
    %448 = vmatprep.mubr.bf16.mxu0 0
    %449 = vmatmul.mubr.bf16.gmra.mxu0 %v358
    %v450 = vpop.f32.mrf.mxu0
    %v451 = vadd.f32 %v318, %v450
    %v452 = vpop.f32.mrf.mxu0
    %v453 = vpop.f32.mrf.mxu0
    %v454 = vadd.f32 %v318, %v453
    %v455 = vpop.f32.mrf.mxu0
    %456 = vmatprep.mubr.bf16.mxu0 0
    %457 = vmatmul.mubr.bf16.gmra.mxu0 %v359
    %v458 = vpop.f32.mrf.mxu0
    %v459 = vadd.f32 %v318, %v458
    %v460 = vpop.f32.mrf.mxu0
    %v461 = vpop.f32.mrf.mxu0
    %v462 = vadd.f32 %v318, %v461
    %v463 = vpop.f32.mrf.mxu0
    %464 = vdwg.mxu0
    %v465 = vmax.f32 %v403, 0.0
    %v466 = vmax.f32 %v406, 0.0
    %v467 = vmax.f32 %v411, 0.0
    %v468 = vmax.f32 %v414, 0.0
    %v469 = vmax.f32 %v419, 0.0
    %v470 = vmax.f32 %v422, 0.0
    %v471 = vmax.f32 %v427, 0.0
    %v472 = vmax.f32 %v430, 0.0
    %v473 = vmax.f32 %v435, 0.0
    %v474 = vmax.f32 %v438, 0.0
    %v475 = vmax.f32 %v443, 0.0
    %v476 = vmax.f32 %v446, 0.0
    %v477 = vmax.f32 %v451, 0.0
    %v478 = vmax.f32 %v454, 0.0
    %v479 = vmax.f32 %v459, 0.0
    %v480 = vmax.f32 %v462, 0.0
    %v481 = vpack.c.bf16 %v466, %v465
    %v482 = vpack.c.bf16 %v468, %v467
    %v483 = vpack.c.bf16 %v470, %v469
    %v484 = vpack.c.bf16 %v472, %v471
    %v485 = vpack.c.bf16 %v474, %v473
    %v486 = vpack.c.bf16 %v476, %v475
    %v487 = vpack.c.bf16 %v478, %v477
    %v488 = vpack.c.bf16 %v480, %v479
    %v489 = vld [vmem:[#allocation3] sm:$0xf]
    %v490 = vld [vmem:[#allocation3 + $0x4] sm:$0xf]
    %v491 = vld [vmem:[#allocation3 + $0x8] sm:$0xf]
    %v492 = vld [vmem:[#allocation3 + $0xc] sm:$0xf]
    %v493 = vld [vmem:[#allocation3 + $0x10] sm:$0xf]
    %v494 = vld [vmem:[#allocation3 + $0x14] sm:$0xf]
    %v495 = vld [vmem:[#allocation3 + $0x18] sm:$0xf]
    %v496 = vld [vmem:[#allocation3 + $0x1c] sm:$0xf]
    %v497 = vld [vmem:[#allocation3 + $0x20] sm:$0xf]
    %v498 = vld [vmem:[#allocation3 + $0x24] sm:$0xf]
    %v499 = vld [vmem:[#allocation3 + $0x28] sm:$0xf]
    %v500 = vld [vmem:[#allocation3 + $0x2c] sm:$0xf]
    %v501 = vld [vmem:[#allocation3 + $0x30] sm:$0xf]
    %v502 = vld [vmem:[#allocation3 + $0x34] sm:$0xf]
    %v503 = vld [vmem:[#allocation3 + $0x38] sm:$0xf]
    %v504 = vld [vmem:[#allocation3 + $0x3c] sm:$0xf]
    %v521 = vunpack.c.l.b16 %v489
    %v522 = vunpack.c.l.b16 %v490
    %v523 = vunpack.c.l.b16 %v491
    %v524 = vunpack.c.l.b16 %v492
    %v525 = vunpack.c.l.b16 %v493
    %v526 = vunpack.c.l.b16 %v494
    %v527 = vunpack.c.l.b16 %v495
    %v528 = vunpack.c.l.b16 %v496
    %v529 = vunpack.c.l.b16 %v497
    %v530 = vunpack.c.l.b16 %v498
    %v531 = vunpack.c.l.b16 %v499
    %v532 = vunpack.c.l.b16 %v500
    %v533 = vunpack.c.l.b16 %v501
    %v534 = vunpack.c.l.b16 %v502
    %v535 = vunpack.c.l.b16 %v503
    %v536 = vunpack.c.l.b16 %v504
    %v537 = vpack.c.b16 %v522, %v521
    %v538 = vpack.c.b16 %v524, %v523
    %v539 = vpack.c.b16 %v526, %v525
    %v540 = vpack.c.b16 %v528, %v527
    %v541 = vpack.c.b16 %v530, %v529
    %v542 = vpack.c.b16 %v532, %v531
    %v543 = vpack.c.b16 %v534, %v533
    %v544 = vpack.c.b16 %v536, %v535
    %553 = vmatprep.subr.bf16.mxu0 0
    %554 = vmatpush1.bf16.msra.mxu0 %v544
    %555 = vmatprep.subr.bf16.mxu0 0
    %556 = vmatpush1.bf16.msra.mxu0 %v543
    %557 = vmatprep.subr.bf16.mxu0 0
    %558 = vmatpush1.bf16.msra.mxu0 %v542
    %559 = vmatprep.subr.bf16.mxu0 0
    %560 = vmatpush1.bf16.msra.mxu0 %v541
    %561 = vmatprep.subr.bf16.mxu0 0
    %562 = vmatpush1.bf16.msra.mxu0 %v540
    %563 = vmatprep.subr.bf16.mxu0 0
    %564 = vmatpush1.bf16.msra.mxu0 %v539
    %565 = vmatprep.subr.bf16.mxu0 0
    %566 = vmatpush1.bf16.msra.mxu0 %v538
    %567 = vmatprep.subr.bf16.mxu0 0
    %568 = vmatpush1.bf16.msra.mxu0 %v537
    %569 = vmatprep.subr.bf16.mxu0 0
    %570 = vmatpush2.bf16.msra.mxu0 0
    %571 = vmatprep.subr.bf16.mxu0 0
    %572 = vmatpush2.bf16.msra.mxu0 0
    %573 = vmatprep.subr.bf16.mxu0 0
    %574 = vmatpush2.bf16.msra.mxu0 0
    %575 = vmatprep.subr.bf16.mxu0 0
    %576 = vmatpush2.bf16.msra.mxu0 0
    %577 = vmatprep.subr.bf16.mxu0 0
    %578 = vmatpush2.bf16.msra.mxu0 0
    %579 = vmatprep.subr.bf16.mxu0 0
    %580 = vmatpush2.bf16.msra.mxu0 0
    %581 = vmatprep.subr.bf16.mxu0 0
    %582 = vmatpush2.bf16.msra.mxu0 0
    %583 = vmatprep.subr.bf16.mxu0 0
    %584 = vmatpush2.bf16.msra.mxu0 0
    %585 = vmatprep.mubr.bf16.mxu0 0
    %586 = vmatmul.mubr.bf16.gmra.mxu0 %v481
    %v587 = vpop.f32.mrf.mxu0
    %v588 = vadd.f32 0.0, %v587
    %v589 = vpop.f32.mrf.mxu0
    %v590 = vpop.f32.mrf.mxu0
    %v591 = vadd.f32 0.0, %v590
    %v592 = vpop.f32.mrf.mxu0
    %593 = vmatprep.mubr.bf16.mxu0 0
    %594 = vmatmul.mubr.bf16.gmra.mxu0 %v482
    %v595 = vpop.f32.mrf.mxu0
    %v596 = vadd.f32 0.0, %v595
    %v597 = vpop.f32.mrf.mxu0
    %v598 = vpop.f32.mrf.mxu0
    %v599 = vadd.f32 0.0, %v598
    %v600 = vpop.f32.mrf.mxu0
    %601 = vmatprep.mubr.bf16.mxu0 0
    %602 = vmatmul.mubr.bf16.gmra.mxu0 %v483
    %v603 = vpop.f32.mrf.mxu0
    %v604 = vadd.f32 0.0, %v603
    %v605 = vpop.f32.mrf.mxu0
    %v606 = vpop.f32.mrf.mxu0
    %v607 = vadd.f32 0.0, %v606
    %v608 = vpop.f32.mrf.mxu0
    %609 = vmatprep.mubr.bf16.mxu0 0
    %610 = vmatmul.mubr.bf16.gmra.mxu0 %v484
    %v611 = vpop.f32.mrf.mxu0
    %v612 = vadd.f32 0.0, %v611
    %v613 = vpop.f32.mrf.mxu0
    %v614 = vpop.f32.mrf.mxu0
    %v615 = vadd.f32 0.0, %v614
    %v616 = vpop.f32.mrf.mxu0
    %617 = vmatprep.mubr.bf16.mxu0 0
    %618 = vmatmul.mubr.bf16.gmra.mxu0 %v485
    %v619 = vpop.f32.mrf.mxu0
    %v620 = vadd.f32 0.0, %v619
    %v621 = vpop.f32.mrf.mxu0
    %v622 = vpop.f32.mrf.mxu0
    %v623 = vadd.f32 0.0, %v622
    %v624 = vpop.f32.mrf.mxu0
    %625 = vmatprep.mubr.bf16.mxu0 0
    %626 = vmatmul.mubr.bf16.gmra.mxu0 %v486
    %v627 = vpop.f32.mrf.mxu0
    %v628 = vadd.f32 0.0, %v627
    %v629 = vpop.f32.mrf.mxu0
    %v630 = vpop.f32.mrf.mxu0
    %v631 = vadd.f32 0.0, %v630
    %v632 = vpop.f32.mrf.mxu0
    %633 = vmatprep.mubr.bf16.mxu0 0
    %634 = vmatmul.mubr.bf16.gmra.mxu0 %v487
    %v635 = vpop.f32.mrf.mxu0
    %v636 = vadd.f32 0.0, %v635
    %v637 = vpop.f32.mrf.mxu0
    %v638 = vpop.f32.mrf.mxu0
    %v639 = vadd.f32 0.0, %v638
    %v640 = vpop.f32.mrf.mxu0
    %641 = vmatprep.mubr.bf16.mxu0 0
    %642 = vmatmul.mubr.bf16.gmra.mxu0 %v488
    %v643 = vpop.f32.mrf.mxu0
    %v644 = vadd.f32 0.0, %v643
    %v645 = vpop.f32.mrf.mxu0
    %v646 = vpop.f32.mrf.mxu0
    %v647 = vadd.f32 0.0, %v646
    %v648 = vpop.f32.mrf.mxu0
    %649 = vdwg.mxu0
    %v650 = vpack.c.bf16 %v591, %v588
    %v651 = vpack.c.bf16 %v599, %v596
    %v652 = vpack.c.bf16 %v607, %v604
    %v653 = vpack.c.bf16 %v615, %v612
    %v654 = vpack.c.bf16 %v623, %v620
    %v655 = vpack.c.bf16 %v631, %v628
    %v656 = vpack.c.bf16 %v639, %v636
    %v657 = vpack.c.bf16 %v647, %v644
    %v658 = vld [vmem:[%s5] sm:$0x1]
    %v660 = vlaneseq
    %v661 = vshrl.u32 %v660, 7
    %v662 = vsub.s32 0, %v661
    %v663 = vrot.slane %v658, %v662
    %665 = vmatprep.subr.bf16.mxu0 0
    %666 = vmatpush1.bf16.msra.mxu0 %v657
    %667 = vmatprep.subr.bf16.mxu0 0
    %668 = vmatpush1.bf16.msra.mxu0 %v656
    %669 = vmatprep.subr.bf16.mxu0 0
    %670 = vmatpush1.bf16.msra.mxu0 %v655
    %671 = vmatprep.subr.bf16.mxu0 0
    %672 = vmatpush1.bf16.msra.mxu0 %v654
    %673 = vmatprep.subr.bf16.mxu0 0
    %674 = vmatpush1.bf16.msra.mxu0 %v653
    %675 = vmatprep.subr.bf16.mxu0 0
    %676 = vmatpush1.bf16.msra.mxu0 %v652
    %677 = vmatprep.subr.bf16.mxu0 0
    %678 = vmatpush1.bf16.msra.mxu0 %v651
    %679 = vmatprep.subr.bf16.mxu0 0
    %680 = vmatpush1.bf16.msra.mxu0 %v650
    %681 = vmatprep.subr.bf16.mxu0 0
    %682 = vmatpush2.bf16.msra.mxu0 0
    %683 = vmatprep.subr.bf16.mxu0 0
    %684 = vmatpush2.bf16.msra.mxu0 0
    %685 = vmatprep.subr.bf16.mxu0 0
    %686 = vmatpush2.bf16.msra.mxu0 0
    %687 = vmatprep.subr.bf16.mxu0 0
    %688 = vmatpush2.bf16.msra.mxu0 0
    %689 = vmatprep.subr.bf16.mxu0 0
    %690 = vmatpush2.bf16.msra.mxu0 0
    %691 = vmatprep.subr.bf16.mxu0 0
    %692 = vmatpush2.bf16.msra.mxu0 0
    %693 = vmatprep.subr.bf16.mxu0 0
    %694 = vmatpush2.bf16.msra.mxu0 0
    %695 = vmatprep.subr.bf16.mxu0 0
    %696 = vmatpush2.bf16.msra.mxu0 0
    %697 = vmatprep.mubr.bf16.mxu0 0
    %698 = vmatmul.mubr.bf16.gmra.mxu0 %v352
    %v699 = vpop.f32.mrf.mxu0
    %v700 = vadd.f32 %v663, %v699
    %v701 = vpop.f32.mrf.mxu0
    %v702 = vpop.f32.mrf.mxu0
    %v703 = vadd.f32 %v663, %v702
    %v704 = vpop.f32.mrf.mxu0
    %705 = vmatprep.mubr.bf16.mxu0 0
    %706 = vmatmul.mubr.bf16.gmra.mxu0 %v353
    %v707 = vpop.f32.mrf.mxu0
    %v708 = vadd.f32 %v663, %v707
    %v709 = vpop.f32.mrf.mxu0
    %v710 = vpop.f32.mrf.mxu0
    %v711 = vadd.f32 %v663, %v710
    %v712 = vpop.f32.mrf.mxu0
    %713 = vmatprep.mubr.bf16.mxu0 0
    %714 = vmatmul.mubr.bf16.gmra.mxu0 %v354
    %v715 = vpop.f32.mrf.mxu0
    %v716 = vadd.f32 %v663, %v715
    %v717 = vpop.f32.mrf.mxu0
    %v718 = vpop.f32.mrf.mxu0
    %v719 = vadd.f32 %v663, %v718
    %v720 = vpop.f32.mrf.mxu0
    %721 = vmatprep.mubr.bf16.mxu0 0
    %722 = vmatmul.mubr.bf16.gmra.mxu0 %v355
    %v723 = vpop.f32.mrf.mxu0
    %v724 = vadd.f32 %v663, %v723
    %v725 = vpop.f32.mrf.mxu0
    %v726 = vpop.f32.mrf.mxu0
    %v727 = vadd.f32 %v663, %v726
    %v728 = vpop.f32.mrf.mxu0
    %729 = vmatprep.mubr.bf16.mxu0 0
    %730 = vmatmul.mubr.bf16.gmra.mxu0 %v356
    %v731 = vpop.f32.mrf.mxu0
    %v732 = vadd.f32 %v663, %v731
    %v733 = vpop.f32.mrf.mxu0
    %v734 = vpop.f32.mrf.mxu0
    %v735 = vadd.f32 %v663, %v734
    %v736 = vpop.f32.mrf.mxu0
    %737 = vmatprep.mubr.bf16.mxu0 0
    %738 = vmatmul.mubr.bf16.gmra.mxu0 %v357
    %v739 = vpop.f32.mrf.mxu0
    %v740 = vadd.f32 %v663, %v739
    %v741 = vpop.f32.mrf.mxu0
    %v742 = vpop.f32.mrf.mxu0
    %v743 = vadd.f32 %v663, %v742
    %v744 = vpop.f32.mrf.mxu0
    %745 = vmatprep.mubr.bf16.mxu0 0
    %746 = vmatmul.mubr.bf16.gmra.mxu0 %v358
    %v747 = vpop.f32.mrf.mxu0
    %v748 = vadd.f32 %v663, %v747
    %v749 = vpop.f32.mrf.mxu0
    %v750 = vpop.f32.mrf.mxu0
    %v751 = vadd.f32 %v663, %v750
    %v752 = vpop.f32.mrf.mxu0
    %753 = vmatprep.mubr.bf16.mxu0 0
    %754 = vmatmul.mubr.bf16.gmra.mxu0 %v359
    %v755 = vpop.f32.mrf.mxu0
    %v756 = vadd.f32 %v663, %v755
    %v757 = vpop.f32.mrf.mxu0
    %v758 = vpop.f32.mrf.mxu0
    %v759 = vadd.f32 %v663, %v758
    %v760 = vpop.f32.mrf.mxu0
    %761 = vdwg.mxu0
    %v762 = vpack.c.bf16 %v703, %v700
    %v763 = vpack.c.bf16 %v711, %v708
    %v764 = vpack.c.bf16 %v719, %v716
    %v765 = vpack.c.bf16 %v727, %v724
    %v766 = vpack.c.bf16 %v735, %v732
    %v767 = vpack.c.bf16 %v743, %v740
    %v768 = vpack.c.bf16 %v751, %v748
    %v769 = vpack.c.bf16 %v759, %v756
    %v778 = vunpack.c.l.b16 %v762
    %v779 = vunpack.c.h.b16 %v762
    %v780 = vunpack.c.l.b16 %v763
    %v781 = vunpack.c.h.b16 %v763
    %v782 = vunpack.c.l.b16 %v764
    %v783 = vunpack.c.h.b16 %v764
    %v784 = vunpack.c.l.b16 %v765
    %v785 = vunpack.c.h.b16 %v765
    %v786 = vunpack.c.l.b16 %v766
    %v787 = vunpack.c.h.b16 %v766
    %v788 = vunpack.c.l.b16 %v767
    %v789 = vunpack.c.h.b16 %v767
    %v790 = vunpack.c.l.b16 %v768
    %v791 = vunpack.c.h.b16 %v768
    %v792 = vunpack.c.l.b16 %v769
    %v793 = vunpack.c.h.b16 %v769
    %v794 = vpack.c.b16 %v778, %v778
    %v795 = vpack.c.b16 %v779, %v779
    %v796 = vpack.c.b16 %v780, %v780
    %v797 = vpack.c.b16 %v781, %v781
    %v798 = vpack.c.b16 %v782, %v782
    %v799 = vpack.c.b16 %v783, %v783
    %v800 = vpack.c.b16 %v784, %v784
    %v801 = vpack.c.b16 %v785, %v785
    %v802 = vpack.c.b16 %v786, %v786
    %v803 = vpack.c.b16 %v787, %v787
    %v804 = vpack.c.b16 %v788, %v788
    %v805 = vpack.c.b16 %v789, %v789
    %v806 = vpack.c.b16 %v790, %v790
    %v807 = vpack.c.b16 %v791, %v791
    %v808 = vpack.c.b16 %v792, %v792
    %v809 = vpack.c.b16 %v793, %v793
    %826 = vst [vmem:[%s6] sm:$0xf] %v794
    %827 = vst [vmem:[%s6 + $0x4] sm:$0xf] %v795
    %828 = vst [vmem:[%s6 + $0x8] sm:$0xf] %v796
    %829 = vst [vmem:[%s6 + $0xc] sm:$0xf] %v797
    %830 = vst [vmem:[%s6 + $0x10] sm:$0xf] %v798
    %831 = vst [vmem:[%s6 + $0x14] sm:$0xf] %v799
    %832 = vst [vmem:[%s6 + $0x18] sm:$0xf] %v800
    %833 = vst [vmem:[%s6 + $0x1c] sm:$0xf] %v801
    %834 = vst [vmem:[%s6 + $0x20] sm:$0xf] %v802
    %835 = vst [vmem:[%s6 + $0x24] sm:$0xf] %v803
    %836 = vst [vmem:[%s6 + $0x28] sm:$0xf] %v804
    %837 = vst [vmem:[%s6 + $0x2c] sm:$0xf] %v805
    %838 = vst [vmem:[%s6 + $0x30] sm:$0xf] %v806
    %839 = vst [vmem:[%s6 + $0x34] sm:$0xf] %v807
    %840 = vst [vmem:[%s6 + $0x38] sm:$0xf] %v808
    %841 = vst [vmem:[%s6 + $0x3c] sm:$0xf] %v809
    // Predicated region
    $region30: #{gcn_forward.1} parent=1 // pred_check
      _
    $region31: #{gcn_forward.1} parent=1 // pred_check_branch
      %843 = sbr.rel (0) target = $region33
    $region32: #{gcn_forward.1} parent=1 // pred_region
      _
    $region33: #{gcn_forward.1} parent=1 // pred_fallthru
      _
    // Predicated region
    $region34: #{gcn_forward.1} parent=1 // pred_check
      _
    $region35: #{gcn_forward.1} parent=1 // pred_check_branch
      %845 = sbr.rel (0) target = $region37
    $region36: #{gcn_forward.1} parent=1 // pred_region
      _
    $region37: #{gcn_forward.1} parent=1 // pred_fallthru
      _
    %846 = vsyncpa [#allocation4], 1

</llo_original>
